<compile_context>
chip_gen: v7x
topology: tpu7x:2x2x1
jax: 0.10.0
libtpu: 0.0.40
codegen_flags: <defaults>
</compile_context>

<pallas_src>
import jax
import jax.numpy as jnp
from jax.experimental import pallas as pl
from jax.experimental.pallas import tpu as pltpu


def _round_up(n, m):
    return ((n + m - 1) // m) * m


def _mlp_kernel(x_ref,
                w0_ref, b0_ref,
                w1_ref, b1_ref,
                w2_ref, b2_ref,
                wc_ref, bc_ref,
                out_ref):
    """Feature-major micro-MLP for one batch tile.

    x_ref   : [2, TB]  VMEM  (batch on the lane axis -> lane-dense)
    w*_ref  : [4, in]  SMEM  (tiny scalar weights, PyTorch [out, in] layout)
    b*_ref  : [4]      SMEM
    out_ref : [16, TB] VMEM  packed rows (x0 | x1 | x2 | y)
    """

    def dense(w_sm, b_sm, rows_in, out_f, base, relu):
        in_f = len(rows_in)
        rows_out = []
        for o in range(out_f):
            # Unrolled VPU broadcast-FMA chain over K = 2..4 inputs:
            #   h[o, :] = sum_k w[o, k] * x[k, :] + b[o]
            acc = rows_in[0] * w_sm[o, 0]
            for k in range(1, in_f):
                acc = acc + rows_in[k] * w_sm[o, k]
            acc = acc + b_sm[o]
            if relu:
                acc = jnp.maximum(acc, 0.0)
            out_ref[base + o:base + o + 1, :] = acc   # lane-dense [1, TB] store
            rows_out.append(acc)
        return rows_out

    x_rows = [x_ref[k:k + 1, :] for k in range(2)]          # [1, TB] each
    h0 = dense(w0_ref, b0_ref, x_rows, 4, 0, relu=True)     # x0 -> rows 0..3
    h1 = dense(w1_ref, b1_ref, h0, 4, 4, relu=True)         # x1 -> rows 4..7
    h2 = dense(w2_ref, b2_ref, h1, 4, 8, relu=True)         # x2 -> rows 8..11
    dense(wc_ref, bc_ref, h2, 4, 12, relu=False)            # y  -> rows 12..15


def simple_linear_net(x, params, block_b=16384):
    """x: [B, 2] float32. Returns (x0, x1, x2, y), each [B, 4] (PyTorch layout).

    block_b is the batch tile (lane) size; it is a sweep parameter. Per tile
    VMEM is ~72 B * TB (double-buffered), so even 16K rows is only ~2.4 MiB.
    """
    B = x.shape[0]
    dt = x.dtype

    # Batch tile: multiple of 128 (lane width), capped by the padded batch.
    TB = min(block_b, _round_up(B, 128))
    B_pad = _round_up(B, TB)

    # Feature-major layout: batch on the lane axis. Pad batch to a tile multiple.
    xt = jnp.zeros((2, B_pad), dt).at[:, :B].set(x.T)

    grid = (B_pad // TB,)

    x_spec = pl.BlockSpec((2, TB), lambda i: (0, i))
    out_spec = pl.BlockSpec((16, TB), lambda i: (0, i))
    # Whole-array SMEM residency for the ~100 scalar weights: fetched once,
    # reused across all batch-grid steps.
    smem = pl.BlockSpec(memory_space=pltpu.MemorySpace.SMEM)

    packed = pl.pallas_call(
        _mlp_kernel,
        out_shape=jax.ShapeDtypeStruct((16, B_pad), dt),
        grid=grid,
        in_specs=[x_spec] + [smem] * 8,
        out_specs=out_spec,
        compiler_params=pltpu.CompilerParams(
            dimension_semantics=("parallel",)),   # megacore / v7x dual-TC
    )(xt,
      params["w0"], params["b0"],
      params["w1"], params["b1"],
      params["w2"], params["b2"],
      params["wc"], params["bc"])

    # Unpack to PyTorch-style [B, 4] outputs (layout plumbing in the wrapper).
    x0 = packed[0:4, :B].T
    x1 = packed[4:8, :B].T
    x2 = packed[8:12, :B].T
    y = packed[12:16, :B].T
    return x0, x1, x2, y


def init_params(key):
    """Deterministic init mimicking PyTorch's default Linear init:
    uniform(-1/sqrt(fan_in), +1/sqrt(fan_in)). Weights kept in PyTorch
    [out_features, in_features] layout (used directly as W @ x)."""
    def linear(k, fan_in, fan_out):
        kw, kb = jax.random.split(k)
        bound = 1.0 / jnp.sqrt(float(fan_in))
        w = jax.random.uniform(kw, (fan_out, fan_in), jnp.float32, -bound, bound)
        b = jax.random.uniform(kb, (fan_out,), jnp.float32, -bound, bound)
        return w, b

    k0, k1, k2, kc = jax.random.split(key, 4)
    w0, b0 = linear(k0, 2, 4)
    w1, b1 = linear(k1, 4, 4)
    w2, b2 = linear(k2, 4, 4)
    wc, bc = linear(kc, 4, 4)
    return dict(w0=w0, b0=b0, w1=w1, b1=b1, w2=w2, b2=b2, wc=wc, bc=bc)


def reference_forward(x, p):
    h0 = jnp.maximum(x @ p["w0"].T + p["b0"], 0.0)
    h1 = jnp.maximum(h0 @ p["w1"].T + p["b1"], 0.0)
    h2 = jnp.maximum(h1 @ p["w2"].T + p["b2"], 0.0)
    y = h2 @ p["wc"].T + p["bc"]
    return h0, h1, h2, y


if __name__ == "__main__":
    key = jax.random.PRNGKey(0)
    k_in, k_params = jax.random.split(key)

    batch = 8
    x = jax.random.normal(k_in, (batch, 2), jnp.float32)
    params = init_params(k_params)

    x0, x1, x2, y = simple_linear_net(x, params)
    jax.block_until_ready((x0, x1, x2, y))

    # Correctness check against plain-JAX reference (PyTorch semantics).
    r0, r1, r2, ry = reference_forward(x, params)
    assert x0.shape == (batch, 4) and y.shape == (batch, 4)
    assert jnp.allclose(x0, r0, atol=1e-5), "x0 mismatch"
    assert jnp.allclose(x1, r1, atol=1e-5), "x1 mismatch"
    assert jnp.allclose(x2, r2, atol=1e-5), "x2 mismatch"
    assert jnp.allclose(y, ry, atol=1e-5), "y mismatch"

    print("KERNEL_OK")
</pallas_src>

<mosaic_0001>
module attributes {stable_mosaic.version = 11 : i64} {
  func.func @_mlp_kernel(%arg0: i32, %arg1: memref<2x128xf32, #tpu.memory_space<vmem>>, %arg2: memref<4x2xf32, #tpu.memory_space<smem>>, %arg3: memref<4xf32, #tpu.memory_space<smem>>, %arg4: memref<4x4xf32, #tpu.memory_space<smem>>, %arg5: memref<4xf32, #tpu.memory_space<smem>>, %arg6: memref<4x4xf32, #tpu.memory_space<smem>>, %arg7: memref<4xf32, #tpu.memory_space<smem>>, %arg8: memref<4x4xf32, #tpu.memory_space<smem>>, %arg9: memref<4xf32, #tpu.memory_space<smem>>, %arg10: memref<16x128xf32, #tpu.memory_space<vmem>>) attributes {dimension_semantics = [#tpu.dimension_semantics<parallel>], iteration_bounds = array<i64: 1>, scalar_prefetch = 0 : i64, scratch_operands = 0 : i64, tpu.core_type = #tpu.core_type<tc>, window_params = [{transform_indices = @transform_0, window_bounds = array<i64: 2, 128>}, {transform_indices = @transform_1, window_bounds = array<i64: 4, 2>}, {transform_indices = @transform_2, window_bounds = array<i64: 4>}, {transform_indices = @transform_3, window_bounds = array<i64: 4, 4>}, {transform_indices = @transform_4, window_bounds = array<i64: 4>}, {transform_indices = @transform_5, window_bounds = array<i64: 4, 4>}, {transform_indices = @transform_6, window_bounds = array<i64: 4>}, {transform_indices = @transform_7, window_bounds = array<i64: 4, 4>}, {transform_indices = @transform_8, window_bounds = array<i64: 4>}, {transform_indices = @transform_9, window_bounds = array<i64: 16, 128>}]} {
    %c0 = arith.constant 0 : index
    %c0_0 = arith.constant 0 : index
    %0 = vector.load %arg1[%c0, %c0_0] : memref<2x128xf32, #tpu.memory_space<vmem>>, vector<1x128xf32>
    %c1 = arith.constant 1 : index
    %c0_1 = arith.constant 0 : index
    %1 = vector.load %arg1[%c1, %c0_1] : memref<2x128xf32, #tpu.memory_space<vmem>>, vector<1x128xf32>
    %c0_2 = arith.constant 0 : index
    %c0_3 = arith.constant 0 : index
    %2 = memref.load %arg2[%c0_2, %c0_3] : memref<4x2xf32, #tpu.memory_space<smem>>
    %3 = vector.broadcast %2 : f32 to vector<1x128xf32>
    %4 = arith.mulf %0, %3 : vector<1x128xf32>
    %c0_4 = arith.constant 0 : index
    %c1_5 = arith.constant 1 : index
    %5 = memref.load %arg2[%c0_4, %c1_5] : memref<4x2xf32, #tpu.memory_space<smem>>
    %6 = vector.broadcast %5 : f32 to vector<1x128xf32>
    %7 = arith.mulf %1, %6 : vector<1x128xf32>
    %8 = arith.addf %4, %7 : vector<1x128xf32>
    %c0_6 = arith.constant 0 : index
    %9 = memref.load %arg3[%c0_6] : memref<4xf32, #tpu.memory_space<smem>>
    %10 = vector.broadcast %9 : f32 to vector<1x128xf32>
    %11 = arith.addf %8, %10 : vector<1x128xf32>
    %cst = arith.constant 0.000000e+00 : f32
    %12 = vector.broadcast %cst : f32 to vector<1x128xf32>
    %13 = arith.maximumf %11, %12 : vector<1x128xf32>
    %c0_7 = arith.constant 0 : index
    %c0_8 = arith.constant 0 : index
    %14 = vector.load %arg10[%c0_7, %c0_8] : memref<16x128xf32, #tpu.memory_space<vmem>>, vector<1x128xf32>
    tpu.vector_store %arg10[%c0_7, %c0_8], %13 {strides = array<i32>} : memref<16x128xf32, #tpu.memory_space<vmem>>, vector<1x128xf32>,
    %c1_9 = arith.constant 1 : index
    %c0_10 = arith.constant 0 : index
    %15 = memref.load %arg2[%c1_9, %c0_10] : memref<4x2xf32, #tpu.memory_space<smem>>
    %16 = vector.broadcast %15 : f32 to vector<1x128xf32>
    %17 = arith.mulf %0, %16 : vector<1x128xf32>
    %c1_11 = arith.constant 1 : index
    %c1_12 = arith.constant 1 : index
    %18 = memref.load %arg2[%c1_11, %c1_12] : memref<4x2xf32, #tpu.memory_space<smem>>
    %19 = vector.broadcast %18 : f32 to vector<1x128xf32>
    %20 = arith.mulf %1, %19 : vector<1x128xf32>
    %21 = arith.addf %17, %20 : vector<1x128xf32>
    %c1_13 = arith.constant 1 : index
    %22 = memref.load %arg3[%c1_13] : memref<4xf32, #tpu.memory_space<smem>>
    %23 = vector.broadcast %22 : f32 to vector<1x128xf32>
    %24 = arith.addf %21, %23 : vector<1x128xf32>
    %cst_14 = arith.constant 0.000000e+00 : f32
    %25 = vector.broadcast %cst_14 : f32 to vector<1x128xf32>
    %26 = arith.maximumf %24, %25 : vector<1x128xf32>
    %c1_15 = arith.constant 1 : index
    %c0_16 = arith.constant 0 : index
    %27 = vector.load %arg10[%c1_15, %c0_16] : memref<16x128xf32, #tpu.memory_space<vmem>>, vector<1x128xf32>
    tpu.vector_store %arg10[%c1_15, %c0_16], %26 {strides = array<i32>} : memref<16x128xf32, #tpu.memory_space<vmem>>, vector<1x128xf32>,
    %c2 = arith.constant 2 : index
    %c0_17 = arith.constant 0 : index
    %28 = memref.load %arg2[%c2, %c0_17] : memref<4x2xf32, #tpu.memory_space<smem>>
    %29 = vector.broadcast %28 : f32 to vector<1x128xf32>
    %30 = arith.mulf %0, %29 : vector<1x128xf32>
    %c2_18 = arith.constant 2 : index
    %c1_19 = arith.constant 1 : index
    %31 = memref.load %arg2[%c2_18, %c1_19] : memref<4x2xf32, #tpu.memory_space<smem>>
    %32 = vector.broadcast %31 : f32 to vector<1x128xf32>
    %33 = arith.mulf %1, %32 : vector<1x128xf32>
    %34 = arith.addf %30, %33 : vector<1x128xf32>
    %c2_20 = arith.constant 2 : index
    %35 = memref.load %arg3[%c2_20] : memref<4xf32, #tpu.memory_space<smem>>
    %36 = vector.broadcast %35 : f32 to vector<1x128xf32>
    %37 = arith.addf %34, %36 : vector<1x128xf32>
    %cst_21 = arith.constant 0.000000e+00 : f32
    %38 = vector.broadcast %cst_21 : f32 to vector<1x128xf32>
    %39 = arith.maximumf %37, %38 : vector<1x128xf32>
    %c2_22 = arith.constant 2 : index
    %c0_23 = arith.constant 0 : index
    %40 = vector.load %arg10[%c2_22, %c0_23] : memref<16x128xf32, #tpu.memory_space<vmem>>, vector<1x128xf32>
    tpu.vector_store %arg10[%c2_22, %c0_23], %39 {strides = array<i32>} : memref<16x128xf32, #tpu.memory_space<vmem>>, vector<1x128xf32>,
    %c3 = arith.constant 3 : index
    %c0_24 = arith.constant 0 : index
    %41 = memref.load %arg2[%c3, %c0_24] : memref<4x2xf32, #tpu.memory_space<smem>>
    %42 = vector.broadcast %41 : f32 to vector<1x128xf32>
    %43 = arith.mulf %0, %42 : vector<1x128xf32>
    %c3_25 = arith.constant 3 : index
    %c1_26 = arith.constant 1 : index
    %44 = memref.load %arg2[%c3_25, %c1_26] : memref<4x2xf32, #tpu.memory_space<smem>>
    %45 = vector.broadcast %44 : f32 to vector<1x128xf32>
    %46 = arith.mulf %1, %45 : vector<1x128xf32>
    %47 = arith.addf %43, %46 : vector<1x128xf32>
    %c3_27 = arith.constant 3 : index
    %48 = memref.load %arg3[%c3_27] : memref<4xf32, #tpu.memory_space<smem>>
    %49 = vector.broadcast %48 : f32 to vector<1x128xf32>
    %50 = arith.addf %47, %49 : vector<1x128xf32>
    %cst_28 = arith.constant 0.000000e+00 : f32
    %51 = vector.broadcast %cst_28 : f32 to vector<1x128xf32>
    %52 = arith.maximumf %50, %51 : vector<1x128xf32>
    %c3_29 = arith.constant 3 : index
    %c0_30 = arith.constant 0 : index
    %53 = vector.load %arg10[%c3_29, %c0_30] : memref<16x128xf32, #tpu.memory_space<vmem>>, vector<1x128xf32>
    tpu.vector_store %arg10[%c3_29, %c0_30], %52 {strides = array<i32>} : memref<16x128xf32, #tpu.memory_space<vmem>>, vector<1x128xf32>,
    %c0_31 = arith.constant 0 : index
    %c0_32 = arith.constant 0 : index
    %54 = memref.load %arg4[%c0_31, %c0_32] : memref<4x4xf32, #tpu.memory_space<smem>>
    %55 = vector.broadcast %54 : f32 to vector<1x128xf32>
    %56 = arith.mulf %13, %55 : vector<1x128xf32>
    %c0_33 = arith.constant 0 : index
    %c1_34 = arith.constant 1 : index
    %57 = memref.load %arg4[%c0_33, %c1_34] : memref<4x4xf32, #tpu.memory_space<smem>>
    %58 = vector.broadcast %57 : f32 to vector<1x128xf32>
    %59 = arith.mulf %26, %58 : vector<1x128xf32>
    %60 = arith.addf %56, %59 : vector<1x128xf32>
    %c0_35 = arith.constant 0 : index
    %c2_36 = arith.constant 2 : index
    %61 = memref.load %arg4[%c0_35, %c2_36] : memref<4x4xf32, #tpu.memory_space<smem>>
    %62 = vector.broadcast %61 : f32 to vector<1x128xf32>
    %63 = arith.mulf %39, %62 : vector<1x128xf32>
    %64 = arith.addf %60, %63 : vector<1x128xf32>
    %c0_37 = arith.constant 0 : index
    %c3_38 = arith.constant 3 : index
    %65 = memref.load %arg4[%c0_37, %c3_38] : memref<4x4xf32, #tpu.memory_space<smem>>
    %66 = vector.broadcast %65 : f32 to vector<1x128xf32>
    %67 = arith.mulf %52, %66 : vector<1x128xf32>
    %68 = arith.addf %64, %67 : vector<1x128xf32>
    %c0_39 = arith.constant 0 : index
    %69 = memref.load %arg5[%c0_39] : memref<4xf32, #tpu.memory_space<smem>>
    %70 = vector.broadcast %69 : f32 to vector<1x128xf32>
    %71 = arith.addf %68, %70 : vector<1x128xf32>
    %cst_40 = arith.constant 0.000000e+00 : f32
    %72 = vector.broadcast %cst_40 : f32 to vector<1x128xf32>
    %73 = arith.maximumf %71, %72 : vector<1x128xf32>
    %c4 = arith.constant 4 : index
    %c0_41 = arith.constant 0 : index
    %74 = vector.load %arg10[%c4, %c0_41] : memref<16x128xf32, #tpu.memory_space<vmem>>, vector<1x128xf32>
    tpu.vector_store %arg10[%c4, %c0_41], %73 {strides = array<i32>} : memref<16x128xf32, #tpu.memory_space<vmem>>, vector<1x128xf32>,
    %c1_42 = arith.constant 1 : index
    %c0_43 = arith.constant 0 : index
    %75 = memref.load %arg4[%c1_42, %c0_43] : memref<4x4xf32, #tpu.memory_space<smem>>
    %76 = vector.broadcast %75 : f32 to vector<1x128xf32>
    %77 = arith.mulf %13, %76 : vector<1x128xf32>
    %c1_44 = arith.constant 1 : index
    %c1_45 = arith.constant 1 : index
    %78 = memref.load %arg4[%c1_44, %c1_45] : memref<4x4xf32, #tpu.memory_space<smem>>
    %79 = vector.broadcast %78 : f32 to vector<1x128xf32>
    %80 = arith.mulf %26, %79 : vector<1x128xf32>
    %81 = arith.addf %77, %80 : vector<1x128xf32>
    %c1_46 = arith.constant 1 : index
    %c2_47 = arith.constant 2 : index
    %82 = memref.load %arg4[%c1_46, %c2_47] : memref<4x4xf32, #tpu.memory_space<smem>>
    %83 = vector.broadcast %82 : f32 to vector<1x128xf32>
    %84 = arith.mulf %39, %83 : vector<1x128xf32>
    %85 = arith.addf %81, %84 : vector<1x128xf32>
    %c1_48 = arith.constant 1 : index
    %c3_49 = arith.constant 3 : index
    %86 = memref.load %arg4[%c1_48, %c3_49] : memref<4x4xf32, #tpu.memory_space<smem>>
    %87 = vector.broadcast %86 : f32 to vector<1x128xf32>
    %88 = arith.mulf %52, %87 : vector<1x128xf32>
    %89 = arith.addf %85, %88 : vector<1x128xf32>
    %c1_50 = arith.constant 1 : index
    %90 = memref.load %arg5[%c1_50] : memref<4xf32, #tpu.memory_space<smem>>
    %91 = vector.broadcast %90 : f32 to vector<1x128xf32>
    %92 = arith.addf %89, %91 : vector<1x128xf32>
    %cst_51 = arith.constant 0.000000e+00 : f32
    %93 = vector.broadcast %cst_51 : f32 to vector<1x128xf32>
    %94 = arith.maximumf %92, %93 : vector<1x128xf32>
    %c5 = arith.constant 5 : index
    %c0_52 = arith.constant 0 : index
    %95 = vector.load %arg10[%c5, %c0_52] : memref<16x128xf32, #tpu.memory_space<vmem>>, vector<1x128xf32>
    tpu.vector_store %arg10[%c5, %c0_52], %94 {strides = array<i32>} : memref<16x128xf32, #tpu.memory_space<vmem>>, vector<1x128xf32>,
    %c2_53 = arith.constant 2 : index
    %c0_54 = arith.constant 0 : index
    %96 = memref.load %arg4[%c2_53, %c0_54] : memref<4x4xf32, #tpu.memory_space<smem>>
    %97 = vector.broadcast %96 : f32 to vector<1x128xf32>
    %98 = arith.mulf %13, %97 : vector<1x128xf32>
    %c2_55 = arith.constant 2 : index
    %c1_56 = arith.constant 1 : index
    %99 = memref.load %arg4[%c2_55, %c1_56] : memref<4x4xf32, #tpu.memory_space<smem>>
    %100 = vector.broadcast %99 : f32 to vector<1x128xf32>
    %101 = arith.mulf %26, %100 : vector<1x128xf32>
    %102 = arith.addf %98, %101 : vector<1x128xf32>
    %c2_57 = arith.constant 2 : index
    %c2_58 = arith.constant 2 : index
    %103 = memref.load %arg4[%c2_57, %c2_58] : memref<4x4xf32, #tpu.memory_space<smem>>
    %104 = vector.broadcast %103 : f32 to vector<1x128xf32>
    %105 = arith.mulf %39, %104 : vector<1x128xf32>
    %106 = arith.addf %102, %105 : vector<1x128xf32>
    %c2_59 = arith.constant 2 : index
    %c3_60 = arith.constant 3 : index
    %107 = memref.load %arg4[%c2_59, %c3_60] : memref<4x4xf32, #tpu.memory_space<smem>>
    %108 = vector.broadcast %107 : f32 to vector<1x128xf32>
    %109 = arith.mulf %52, %108 : vector<1x128xf32>
    %110 = arith.addf %106, %109 : vector<1x128xf32>
    %c2_61 = arith.constant 2 : index
    %111 = memref.load %arg5[%c2_61] : memref<4xf32, #tpu.memory_space<smem>>
    %112 = vector.broadcast %111 : f32 to vector<1x128xf32>
    %113 = arith.addf %110, %112 : vector<1x128xf32>
    %cst_62 = arith.constant 0.000000e+00 : f32
    %114 = vector.broadcast %cst_62 : f32 to vector<1x128xf32>
    %115 = arith.maximumf %113, %114 : vector<1x128xf32>
    %c6 = arith.constant 6 : index
    %c0_63 = arith.constant 0 : index
    %116 = vector.load %arg10[%c6, %c0_63] : memref<16x128xf32, #tpu.memory_space<vmem>>, vector<1x128xf32>
    tpu.vector_store %arg10[%c6, %c0_63], %115 {strides = array<i32>} : memref<16x128xf32, #tpu.memory_space<vmem>>, vector<1x128xf32>,
    %c3_64 = arith.constant 3 : index
    %c0_65 = arith.constant 0 : index
    %117 = memref.load %arg4[%c3_64, %c0_65] : memref<4x4xf32, #tpu.memory_space<smem>>
    %118 = vector.broadcast %117 : f32 to vector<1x128xf32>
    %119 = arith.mulf %13, %118 : vector<1x128xf32>
    %c3_66 = arith.constant 3 : index
    %c1_67 = arith.constant 1 : index
    %120 = memref.load %arg4[%c3_66, %c1_67] : memref<4x4xf32, #tpu.memory_space<smem>>
    %121 = vector.broadcast %120 : f32 to vector<1x128xf32>
    %122 = arith.mulf %26, %121 : vector<1x128xf32>
    %123 = arith.addf %119, %122 : vector<1x128xf32>
    %c3_68 = arith.constant 3 : index
    %c2_69 = arith.constant 2 : index
    %124 = memref.load %arg4[%c3_68, %c2_69] : memref<4x4xf32, #tpu.memory_space<smem>>
    %125 = vector.broadcast %124 : f32 to vector<1x128xf32>
    %126 = arith.mulf %39, %125 : vector<1x128xf32>
    %127 = arith.addf %123, %126 : vector<1x128xf32>
    %c3_70 = arith.constant 3 : index
    %c3_71 = arith.constant 3 : index
    %128 = memref.load %arg4[%c3_70, %c3_71] : memref<4x4xf32, #tpu.memory_space<smem>>
    %129 = vector.broadcast %128 : f32 to vector<1x128xf32>
    %130 = arith.mulf %52, %129 : vector<1x128xf32>
    %131 = arith.addf %127, %130 : vector<1x128xf32>
    %c3_72 = arith.constant 3 : index
    %132 = memref.load %arg5[%c3_72] : memref<4xf32, #tpu.memory_space<smem>>
    %133 = vector.broadcast %132 : f32 to vector<1x128xf32>
    %134 = arith.addf %131, %133 : vector<1x128xf32>
    %cst_73 = arith.constant 0.000000e+00 : f32
    %135 = vector.broadcast %cst_73 : f32 to vector<1x128xf32>
    %136 = arith.maximumf %134, %135 : vector<1x128xf32>
    %c7 = arith.constant 7 : index
    %c0_74 = arith.constant 0 : index
    %137 = vector.load %arg10[%c7, %c0_74] : memref<16x128xf32, #tpu.memory_space<vmem>>, vector<1x128xf32>
    tpu.vector_store %arg10[%c7, %c0_74], %136 {strides = array<i32>} : memref<16x128xf32, #tpu.memory_space<vmem>>, vector<1x128xf32>,
    %c0_75 = arith.constant 0 : index
    %c0_76 = arith.constant 0 : index
    %138 = memref.load %arg6[%c0_75, %c0_76] : memref<4x4xf32, #tpu.memory_space<smem>>
    %139 = vector.broadcast %138 : f32 to vector<1x128xf32>
    %140 = arith.mulf %73, %139 : vector<1x128xf32>
    %c0_77 = arith.constant 0 : index
    %c1_78 = arith.constant 1 : index
    %141 = memref.load %arg6[%c0_77, %c1_78] : memref<4x4xf32, #tpu.memory_space<smem>>
    %142 = vector.broadcast %141 : f32 to vector<1x128xf32>
    %143 = arith.mulf %94, %142 : vector<1x128xf32>
    %144 = arith.addf %140, %143 : vector<1x128xf32>
    %c0_79 = arith.constant 0 : index
    %c2_80 = arith.constant 2 : index
    %145 = memref.load %arg6[%c0_79, %c2_80] : memref<4x4xf32, #tpu.memory_space<smem>>
    %146 = vector.broadcast %145 : f32 to vector<1x128xf32>
    %147 = arith.mulf %115, %146 : vector<1x128xf32>
    %148 = arith.addf %144, %147 : vector<1x128xf32>
    %c0_81 = arith.constant 0 : index
    %c3_82 = arith.constant 3 : index
    %149 = memref.load %arg6[%c0_81, %c3_82] : memref<4x4xf32, #tpu.memory_space<smem>>
    %150 = vector.broadcast %149 : f32 to vector<1x128xf32>
    %151 = arith.mulf %136, %150 : vector<1x128xf32>
    %152 = arith.addf %148, %151 : vector<1x128xf32>
    %c0_83 = arith.constant 0 : index
    %153 = memref.load %arg7[%c0_83] : memref<4xf32, #tpu.memory_space<smem>>
    %154 = vector.broadcast %153 : f32 to vector<1x128xf32>
    %155 = arith.addf %152, %154 : vector<1x128xf32>
    %cst_84 = arith.constant 0.000000e+00 : f32
    %156 = vector.broadcast %cst_84 : f32 to vector<1x128xf32>
    %157 = arith.maximumf %155, %156 : vector<1x128xf32>
    %c8 = arith.constant 8 : index
    %c0_85 = arith.constant 0 : index
    %158 = vector.load %arg10[%c8, %c0_85] : memref<16x128xf32, #tpu.memory_space<vmem>>, vector<1x128xf32>
    tpu.vector_store %arg10[%c8, %c0_85], %157 {strides = array<i32>} : memref<16x128xf32, #tpu.memory_space<vmem>>, vector<1x128xf32>,
    %c1_86 = arith.constant 1 : index
    %c0_87 = arith.constant 0 : index
    %159 = memref.load %arg6[%c1_86, %c0_87] : memref<4x4xf32, #tpu.memory_space<smem>>
    %160 = vector.broadcast %159 : f32 to vector<1x128xf32>
    %161 = arith.mulf %73, %160 : vector<1x128xf32>
    %c1_88 = arith.constant 1 : index
    %c1_89 = arith.constant 1 : index
    %162 = memref.load %arg6[%c1_88, %c1_89] : memref<4x4xf32, #tpu.memory_space<smem>>
    %163 = vector.broadcast %162 : f32 to vector<1x128xf32>
    %164 = arith.mulf %94, %163 : vector<1x128xf32>
    %165 = arith.addf %161, %164 : vector<1x128xf32>
    %c1_90 = arith.constant 1 : index
    %c2_91 = arith.constant 2 : index
    %166 = memref.load %arg6[%c1_90, %c2_91] : memref<4x4xf32, #tpu.memory_space<smem>>
    %167 = vector.broadcast %166 : f32 to vector<1x128xf32>
    %168 = arith.mulf %115, %167 : vector<1x128xf32>
    %169 = arith.addf %165, %168 : vector<1x128xf32>
    %c1_92 = arith.constant 1 : index
    %c3_93 = arith.constant 3 : index
    %170 = memref.load %arg6[%c1_92, %c3_93] : memref<4x4xf32, #tpu.memory_space<smem>>
    %171 = vector.broadcast %170 : f32 to vector<1x128xf32>
    %172 = arith.mulf %136, %171 : vector<1x128xf32>
    %173 = arith.addf %169, %172 : vector<1x128xf32>
    %c1_94 = arith.constant 1 : index
    %174 = memref.load %arg7[%c1_94] : memref<4xf32, #tpu.memory_space<smem>>
    %175 = vector.broadcast %174 : f32 to vector<1x128xf32>
    %176 = arith.addf %173, %175 : vector<1x128xf32>
    %cst_95 = arith.constant 0.000000e+00 : f32
    %177 = vector.broadcast %cst_95 : f32 to vector<1x128xf32>
    %178 = arith.maximumf %176, %177 : vector<1x128xf32>
    %c9 = arith.constant 9 : index
    %c0_96 = arith.constant 0 : index
    %179 = vector.load %arg10[%c9, %c0_96] : memref<16x128xf32, #tpu.memory_space<vmem>>, vector<1x128xf32>
    tpu.vector_store %arg10[%c9, %c0_96], %178 {strides = array<i32>} : memref<16x128xf32, #tpu.memory_space<vmem>>, vector<1x128xf32>,
    %c2_97 = arith.constant 2 : index
    %c0_98 = arith.constant 0 : index
    %180 = memref.load %arg6[%c2_97, %c0_98] : memref<4x4xf32, #tpu.memory_space<smem>>
    %181 = vector.broadcast %180 : f32 to vector<1x128xf32>
    %182 = arith.mulf %73, %181 : vector<1x128xf32>
    %c2_99 = arith.constant 2 : index
    %c1_100 = arith.constant 1 : index
    %183 = memref.load %arg6[%c2_99, %c1_100] : memref<4x4xf32, #tpu.memory_space<smem>>
    %184 = vector.broadcast %183 : f32 to vector<1x128xf32>
    %185 = arith.mulf %94, %184 : vector<1x128xf32>
    %186 = arith.addf %182, %185 : vector<1x128xf32>
    %c2_101 = arith.constant 2 : index
    %c2_102 = arith.constant 2 : index
    %187 = memref.load %arg6[%c2_101, %c2_102] : memref<4x4xf32, #tpu.memory_space<smem>>
    %188 = vector.broadcast %187 : f32 to vector<1x128xf32>
    %189 = arith.mulf %115, %188 : vector<1x128xf32>
    %190 = arith.addf %186, %189 : vector<1x128xf32>
    %c2_103 = arith.constant 2 : index
    %c3_104 = arith.constant 3 : index
    %191 = memref.load %arg6[%c2_103, %c3_104] : memref<4x4xf32, #tpu.memory_space<smem>>
    %192 = vector.broadcast %191 : f32 to vector<1x128xf32>
    %193 = arith.mulf %136, %192 : vector<1x128xf32>
    %194 = arith.addf %190, %193 : vector<1x128xf32>
    %c2_105 = arith.constant 2 : index
    %195 = memref.load %arg7[%c2_105] : memref<4xf32, #tpu.memory_space<smem>>
    %196 = vector.broadcast %195 : f32 to vector<1x128xf32>
    %197 = arith.addf %194, %196 : vector<1x128xf32>
    %cst_106 = arith.constant 0.000000e+00 : f32
    %198 = vector.broadcast %cst_106 : f32 to vector<1x128xf32>
    %199 = arith.maximumf %197, %198 : vector<1x128xf32>
    %c10 = arith.constant 10 : index
    %c0_107 = arith.constant 0 : index
    %200 = vector.load %arg10[%c10, %c0_107] : memref<16x128xf32, #tpu.memory_space<vmem>>, vector<1x128xf32>
    tpu.vector_store %arg10[%c10, %c0_107], %199 {strides = array<i32>} : memref<16x128xf32, #tpu.memory_space<vmem>>, vector<1x128xf32>,
    %c3_108 = arith.constant 3 : index
    %c0_109 = arith.constant 0 : index
    %201 = memref.load %arg6[%c3_108, %c0_109] : memref<4x4xf32, #tpu.memory_space<smem>>
    %202 = vector.broadcast %201 : f32 to vector<1x128xf32>
    %203 = arith.mulf %73, %202 : vector<1x128xf32>
    %c3_110 = arith.constant 3 : index
    %c1_111 = arith.constant 1 : index
    %204 = memref.load %arg6[%c3_110, %c1_111] : memref<4x4xf32, #tpu.memory_space<smem>>
    %205 = vector.broadcast %204 : f32 to vector<1x128xf32>
    %206 = arith.mulf %94, %205 : vector<1x128xf32>
    %207 = arith.addf %203, %206 : vector<1x128xf32>
    %c3_112 = arith.constant 3 : index
    %c2_113 = arith.constant 2 : index
    %208 = memref.load %arg6[%c3_112, %c2_113] : memref<4x4xf32, #tpu.memory_space<smem>>
    %209 = vector.broadcast %208 : f32 to vector<1x128xf32>
    %210 = arith.mulf %115, %209 : vector<1x128xf32>
    %211 = arith.addf %207, %210 : vector<1x128xf32>
    %c3_114 = arith.constant 3 : index
    %c3_115 = arith.constant 3 : index
    %212 = memref.load %arg6[%c3_114, %c3_115] : memref<4x4xf32, #tpu.memory_space<smem>>
    %213 = vector.broadcast %212 : f32 to vector<1x128xf32>
    %214 = arith.mulf %136, %213 : vector<1x128xf32>
    %215 = arith.addf %211, %214 : vector<1x128xf32>
    %c3_116 = arith.constant 3 : index
    %216 = memref.load %arg7[%c3_116] : memref<4xf32, #tpu.memory_space<smem>>
    %217 = vector.broadcast %216 : f32 to vector<1x128xf32>
    %218 = arith.addf %215, %217 : vector<1x128xf32>
    %cst_117 = arith.constant 0.000000e+00 : f32
    %219 = vector.broadcast %cst_117 : f32 to vector<1x128xf32>
    %220 = arith.maximumf %218, %219 : vector<1x128xf32>
    %c11 = arith.constant 11 : index
    %c0_118 = arith.constant 0 : index
    %221 = vector.load %arg10[%c11, %c0_118] : memref<16x128xf32, #tpu.memory_space<vmem>>, vector<1x128xf32>
    tpu.vector_store %arg10[%c11, %c0_118], %220 {strides = array<i32>} : memref<16x128xf32, #tpu.memory_space<vmem>>, vector<1x128xf32>,
    %c0_119 = arith.constant 0 : index
    %c0_120 = arith.constant 0 : index
    %222 = memref.load %arg8[%c0_119, %c0_120] : memref<4x4xf32, #tpu.memory_space<smem>>
    %223 = vector.broadcast %222 : f32 to vector<1x128xf32>
    %224 = arith.mulf %157, %223 : vector<1x128xf32>
    %c0_121 = arith.constant 0 : index
    %c1_122 = arith.constant 1 : index
    %225 = memref.load %arg8[%c0_121, %c1_122] : memref<4x4xf32, #tpu.memory_space<smem>>
    %226 = vector.broadcast %225 : f32 to vector<1x128xf32>
    %227 = arith.mulf %178, %226 : vector<1x128xf32>
    %228 = arith.addf %224, %227 : vector<1x128xf32>
    %c0_123 = arith.constant 0 : index
    %c2_124 = arith.constant 2 : index
    %229 = memref.load %arg8[%c0_123, %c2_124] : memref<4x4xf32, #tpu.memory_space<smem>>
    %230 = vector.broadcast %229 : f32 to vector<1x128xf32>
    %231 = arith.mulf %199, %230 : vector<1x128xf32>
    %232 = arith.addf %228, %231 : vector<1x128xf32>
    %c0_125 = arith.constant 0 : index
    %c3_126 = arith.constant 3 : index
    %233 = memref.load %arg8[%c0_125, %c3_126] : memref<4x4xf32, #tpu.memory_space<smem>>
    %234 = vector.broadcast %233 : f32 to vector<1x128xf32>
    %235 = arith.mulf %220, %234 : vector<1x128xf32>
    %236 = arith.addf %232, %235 : vector<1x128xf32>
    %c0_127 = arith.constant 0 : index
    %237 = memref.load %arg9[%c0_127] : memref<4xf32, #tpu.memory_space<smem>>
    %238 = vector.broadcast %237 : f32 to vector<1x128xf32>
    %239 = arith.addf %236, %238 : vector<1x128xf32>
    %c12 = arith.constant 12 : index
    %c0_128 = arith.constant 0 : index
    %240 = vector.load %arg10[%c12, %c0_128] : memref<16x128xf32, #tpu.memory_space<vmem>>, vector<1x128xf32>
    tpu.vector_store %arg10[%c12, %c0_128], %239 {strides = array<i32>} : memref<16x128xf32, #tpu.memory_space<vmem>>, vector<1x128xf32>,
    %c1_129 = arith.constant 1 : index
    %c0_130 = arith.constant 0 : index
    %241 = memref.load %arg8[%c1_129, %c0_130] : memref<4x4xf32, #tpu.memory_space<smem>>
    %242 = vector.broadcast %241 : f32 to vector<1x128xf32>
    %243 = arith.mulf %157, %242 : vector<1x128xf32>
    %c1_131 = arith.constant 1 : index
    %c1_132 = arith.constant 1 : index
    %244 = memref.load %arg8[%c1_131, %c1_132] : memref<4x4xf32, #tpu.memory_space<smem>>
    %245 = vector.broadcast %244 : f32 to vector<1x128xf32>
    %246 = arith.mulf %178, %245 : vector<1x128xf32>
    %247 = arith.addf %243, %246 : vector<1x128xf32>
    %c1_133 = arith.constant 1 : index
    %c2_134 = arith.constant 2 : index
    %248 = memref.load %arg8[%c1_133, %c2_134] : memref<4x4xf32, #tpu.memory_space<smem>>
    %249 = vector.broadcast %248 : f32 to vector<1x128xf32>
    %250 = arith.mulf %199, %249 : vector<1x128xf32>
    %251 = arith.addf %247, %250 : vector<1x128xf32>
    %c1_135 = arith.constant 1 : index
    %c3_136 = arith.constant 3 : index
    %252 = memref.load %arg8[%c1_135, %c3_136] : memref<4x4xf32, #tpu.memory_space<smem>>
    %253 = vector.broadcast %252 : f32 to vector<1x128xf32>
    %254 = arith.mulf %220, %253 : vector<1x128xf32>
    %255 = arith.addf %251, %254 : vector<1x128xf32>
    %c1_137 = arith.constant 1 : index
    %256 = memref.load %arg9[%c1_137] : memref<4xf32, #tpu.memory_space<smem>>
    %257 = vector.broadcast %256 : f32 to vector<1x128xf32>
    %258 = arith.addf %255, %257 : vector<1x128xf32>
    %c13 = arith.constant 13 : index
    %c0_138 = arith.constant 0 : index
    %259 = vector.load %arg10[%c13, %c0_138] : memref<16x128xf32, #tpu.memory_space<vmem>>, vector<1x128xf32>
    tpu.vector_store %arg10[%c13, %c0_138], %258 {strides = array<i32>} : memref<16x128xf32, #tpu.memory_space<vmem>>, vector<1x128xf32>,
    %c2_139 = arith.constant 2 : index
    %c0_140 = arith.constant 0 : index
    %260 = memref.load %arg8[%c2_139, %c0_140] : memref<4x4xf32, #tpu.memory_space<smem>>
    %261 = vector.broadcast %260 : f32 to vector<1x128xf32>
    %262 = arith.mulf %157, %261 : vector<1x128xf32>
    %c2_141 = arith.constant 2 : index
    %c1_142 = arith.constant 1 : index
    %263 = memref.load %arg8[%c2_141, %c1_142] : memref<4x4xf32, #tpu.memory_space<smem>>
    %264 = vector.broadcast %263 : f32 to vector<1x128xf32>
    %265 = arith.mulf %178, %264 : vector<1x128xf32>
    %266 = arith.addf %262, %265 : vector<1x128xf32>
    %c2_143 = arith.constant 2 : index
    %c2_144 = arith.constant 2 : index
    %267 = memref.load %arg8[%c2_143, %c2_144] : memref<4x4xf32, #tpu.memory_space<smem>>
    %268 = vector.broadcast %267 : f32 to vector<1x128xf32>
    %269 = arith.mulf %199, %268 : vector<1x128xf32>
    %270 = arith.addf %266, %269 : vector<1x128xf32>
    %c2_145 = arith.constant 2 : index
    %c3_146 = arith.constant 3 : index
    %271 = memref.load %arg8[%c2_145, %c3_146] : memref<4x4xf32, #tpu.memory_space<smem>>
    %272 = vector.broadcast %271 : f32 to vector<1x128xf32>
    %273 = arith.mulf %220, %272 : vector<1x128xf32>
    %274 = arith.addf %270, %273 : vector<1x128xf32>
    %c2_147 = arith.constant 2 : index
    %275 = memref.load %arg9[%c2_147] : memref<4xf32, #tpu.memory_space<smem>>
    %276 = vector.broadcast %275 : f32 to vector<1x128xf32>
    %277 = arith.addf %274, %276 : vector<1x128xf32>
    %c14 = arith.constant 14 : index
    %c0_148 = arith.constant 0 : index
    %278 = vector.load %arg10[%c14, %c0_148] : memref<16x128xf32, #tpu.memory_space<vmem>>, vector<1x128xf32>
    tpu.vector_store %arg10[%c14, %c0_148], %277 {strides = array<i32>} : memref<16x128xf32, #tpu.memory_space<vmem>>, vector<1x128xf32>,
    %c3_149 = arith.constant 3 : index
    %c0_150 = arith.constant 0 : index
    %279 = memref.load %arg8[%c3_149, %c0_150] : memref<4x4xf32, #tpu.memory_space<smem>>
    %280 = vector.broadcast %279 : f32 to vector<1x128xf32>
    %281 = arith.mulf %157, %280 : vector<1x128xf32>
    %c3_151 = arith.constant 3 : index
    %c1_152 = arith.constant 1 : index
    %282 = memref.load %arg8[%c3_151, %c1_152] : memref<4x4xf32, #tpu.memory_space<smem>>
    %283 = vector.broadcast %282 : f32 to vector<1x128xf32>
    %284 = arith.mulf %178, %283 : vector<1x128xf32>
    %285 = arith.addf %281, %284 : vector<1x128xf32>
    %c3_153 = arith.constant 3 : index
    %c2_154 = arith.constant 2 : index
    %286 = memref.load %arg8[%c3_153, %c2_154] : memref<4x4xf32, #tpu.memory_space<smem>>
    %287 = vector.broadcast %286 : f32 to vector<1x128xf32>
    %288 = arith.mulf %199, %287 : vector<1x128xf32>
    %289 = arith.addf %285, %288 : vector<1x128xf32>
    %c3_155 = arith.constant 3 : index
    %c3_156 = arith.constant 3 : index
    %290 = memref.load %arg8[%c3_155, %c3_156] : memref<4x4xf32, #tpu.memory_space<smem>>
    %291 = vector.broadcast %290 : f32 to vector<1x128xf32>
    %292 = arith.mulf %220, %291 : vector<1x128xf32>
    %293 = arith.addf %289, %292 : vector<1x128xf32>
    %c3_157 = arith.constant 3 : index
    %294 = memref.load %arg9[%c3_157] : memref<4xf32, #tpu.memory_space<smem>>
    %295 = vector.broadcast %294 : f32 to vector<1x128xf32>
    %296 = arith.addf %293, %295 : vector<1x128xf32>
    %c15 = arith.constant 15 : index
    %c0_158 = arith.constant 0 : index
    %297 = vector.load %arg10[%c15, %c0_158] : memref<16x128xf32, #tpu.memory_space<vmem>>, vector<1x128xf32>
    tpu.vector_store %arg10[%c15, %c0_158], %296 {strides = array<i32>} : memref<16x128xf32, #tpu.memory_space<vmem>>, vector<1x128xf32>,
    return
  }
  func.func @transform_0(%arg0: i32) -> (i32, i32) {
    %c0_i32 = arith.constant 0 : i32
    %c0_i32_0 = arith.constant 0 : i32
    return %c0_i32, %arg0 : i32, i32
  }
  func.func @transform_1(%arg0: i32) -> (i32, i32) {
    %c0_i32 = arith.constant 0 : i32
    %c0_i32_0 = arith.constant 0 : i32
    %c0_i32_1 = arith.constant 0 : i32
    return %c0_i32, %c0_i32_0 : i32, i32
  }
  func.func @transform_2(%arg0: i32) -> i32 {
    %c0_i32 = arith.constant 0 : i32
    %c0_i32_0 = arith.constant 0 : i32
    return %c0_i32 : i32
  }
  func.func @transform_3(%arg0: i32) -> (i32, i32) {
    %c0_i32 = arith.constant 0 : i32
    %c0_i32_0 = arith.constant 0 : i32
    %c0_i32_1 = arith.constant 0 : i32
    return %c0_i32, %c0_i32_0 : i32, i32
  }
  func.func @transform_4(%arg0: i32) -> i32 {
    %c0_i32 = arith.constant 0 : i32
    %c0_i32_0 = arith.constant 0 : i32
    return %c0_i32 : i32
  }
  func.func @transform_5(%arg0: i32) -> (i32, i32) {
    %c0_i32 = arith.constant 0 : i32
    %c0_i32_0 = arith.constant 0 : i32
    %c0_i32_1 = arith.constant 0 : i32
    return %c0_i32, %c0_i32_0 : i32, i32
  }
  func.func @transform_6(%arg0: i32) -> i32 {
    %c0_i32 = arith.constant 0 : i32
    %c0_i32_0 = arith.constant 0 : i32
    return %c0_i32 : i32
  }
  func.func @transform_7(%arg0: i32) -> (i32, i32) {
    %c0_i32 = arith.constant 0 : i32
    %c0_i32_0 = arith.constant 0 : i32
    %c0_i32_1 = arith.constant 0 : i32
    return %c0_i32, %c0_i32_0 : i32, i32
  }
  func.func @transform_8(%arg0: i32) -> i32 {
    %c0_i32 = arith.constant 0 : i32
    %c0_i32_0 = arith.constant 0 : i32
    return %c0_i32 : i32
  }
  func.func @transform_9(%arg0: i32) -> (i32, i32) {
    %c0_i32 = arith.constant 0 : i32
    %c0_i32_0 = arith.constant 0 : i32
    return %c0_i32, %arg0 : i32, i32
  }
}

</mosaic_0001>

<llo_original>
// kernel: tpu_custom_call.1
$region0: #{tpu_custom_call.1}
  #allocation0 [shape = 'u32[]', space=smem, size = 0x4, offset = 0x4, fixed_abs, tag = 'smem constant byte address 0x4 - core index']
  #allocation1 [shape = 'u32[144,128]{1,0:T(1,128)}', space=vmem, size = 0x12000, scoped, tag = 'internal scratch']
  %s0 = inlined_call_operand.hbm [shape: f32[2,128], index: 0, kind: input, shape index: {}]
  %s1 = inlined_call_operand.vmem [shape: f32[4,2], index: 1, kind: input, shape index: {}]
  %s2 = inlined_call_operand.vmem [shape: f32[4], index: 2, kind: input, shape index: {}]
  %s3 = inlined_call_operand.vmem [shape: f32[4,4], index: 3, kind: input, shape index: {}]
  %s4 = inlined_call_operand.vmem [shape: f32[4], index: 4, kind: input, shape index: {}]
  %s5 = inlined_call_operand.vmem [shape: f32[4,4], index: 5, kind: input, shape index: {}]
  %s6 = inlined_call_operand.vmem [shape: f32[4], index: 6, kind: input, shape index: {}]
  %s7 = inlined_call_operand.vmem [shape: f32[4,4], index: 7, kind: input, shape index: {}]
  %s8 = inlined_call_operand.vmem [shape: f32[4], index: 8, kind: input, shape index: {}]
  %s9 = inlined_call_operand.hbm [shape: f32[16,128], index: 9, kind: output, shape index: {}]
  %s10 = sld [smem:[#allocation0]]
  $region82: #{tpu_custom_call.1} parent=0
    _
  %s12 = ssub.s32 1, %s10
  %s13 = scalar_select 0, %s12, %s10
  $region1: #{tpu_custom_call.1} parent=0
    #allocation2 [shape = 'u8[1024]{0}', space=vmem, size = 0x400, scoped, tag = 'input window, operand 0, single buffered']
    #allocation3 [shape = 's32[1]{0}', space=sflag, size = 0x4, scoped, tag = 'scoped memory for tpu_custom_call.1']
    #allocation4 [shape = 's32[1]{0}', space=sflag, size = 0x4, scoped, tag = 'scoped memory for tpu_custom_call.1']
    #allocation5 [shape = 's32[1]{0}', space=sflag, size = 0x4, scoped, tag = 'scoped memory for tpu_custom_call.1']
    #allocation6 [shape = 'u8[2048]{0}', space=smem, size = 0x800, scoped, tag = 'input window, operand 1, single buffered']
    #allocation7 [shape = 'u8[512]{0}', space=smem, size = 0x200, scoped, tag = 'input window, operand 2, single buffered']
    #allocation8 [shape = 's32[1]{0}', space=sflag, size = 0x4, scoped, tag = 'scoped memory for tpu_custom_call.1']
    #allocation9 [shape = 'u8[2048]{0}', space=smem, size = 0x800, scoped, tag = 'input window, operand 3, single buffered']
    #allocation10 [shape = 'u8[512]{0}', space=smem, size = 0x200, scoped, tag = 'input window, operand 4, single buffered']
    #allocation11 [shape = 's32[1]{0}', space=sflag, size = 0x4, scoped, tag = 'scoped memory for tpu_custom_call.1']
    #allocation12 [shape = 'u8[2048]{0}', space=smem, size = 0x800, scoped, tag = 'input window, operand 5, single buffered']
    #allocation13 [shape = 'u8[512]{0}', space=smem, size = 0x200, scoped, tag = 'input window, operand 6, single buffered']
    #allocation14 [shape = 's32[1]{0}', space=sflag, size = 0x4, scoped, tag = 'scoped memory for tpu_custom_call.1']
    #allocation15 [shape = 'u8[2048]{0}', space=smem, size = 0x800, scoped, tag = 'input window, operand 7, single buffered']
    #allocation16 [shape = 'u8[512]{0}', space=smem, size = 0x200, scoped, tag = 'input window, operand 8, single buffered']
    #allocation17 [shape = 's32[1]{0}', space=sflag, size = 0x4, scoped, tag = 'scoped memory for tpu_custom_call.1']
    #allocation18 [shape = 'u8[8192]{0}', space=vmem, size = 0x2000, scoped, tag = 'output window, operand 0, single buffered']
    %14 = vsyncpa [#allocation3], 0
    %15 = vsyncpa [#allocation5], 0
    %16 = vsyncpa [#allocation8], 0
    %17 = vsyncpa [#allocation11], 0
    %18 = vsyncpa [#allocation14], 0
    %19 = vsyncpa [#allocation17], 0
    %20 = vsyncpa [#allocation4], 0
    // Predicated region
    $region2: #{tpu_custom_call.1} parent=1 // pred_check
      _
    $region3: #{tpu_custom_call.1} parent=1 // pred_check_branch
      %22 = sbr.rel (0) target = $region5
    $region4: #{tpu_custom_call.1} parent=1 // pred_region
      %s24 = ssub.s32 32, 32
      %25 = vsyncadd [#allocation3], %s24
      %s27 = sshll.u32 [#allocation2], 4
      %s28 = int_to_ptr.vmem [resolvable:$true] %s27
      %30 = dma.hbm_to_vmem [thread:$0]  %s0, 32, %s28, [#allocation3]
    $region5: #{tpu_custom_call.1} parent=1 // pred_fallthru
      _
    // Predicated region
    $region6: #{tpu_custom_call.1} parent=1 // pred_check
      _
    $region7: #{tpu_custom_call.1} parent=1 // pred_check_branch
      %32 = sbr.rel (0) target = $region9
    $region8: #{tpu_custom_call.1} parent=1 // pred_region
      %s34 = ssub.s32 64, 64
      %35 = vsyncadd [#allocation5], %s34
      %s37 = sshll.u32 %s1, 4
      %s38 = int_to_ptr.vmem [resolvable:$true] %s37
      %40 = dma.vmem_to_smem %s38, 64, [#allocation6], [#allocation5]
    $region9: #{tpu_custom_call.1} parent=1 // pred_fallthru
      _
    // Predicated region
    $region10: #{tpu_custom_call.1} parent=1 // pred_check
      _
    $region11: #{tpu_custom_call.1} parent=1 // pred_check_branch
      %42 = sbr.rel (0) target = $region13
    $region12: #{tpu_custom_call.1} parent=1 // pred_region
      %s44 = ssub.s32 16, 16
      %45 = vsyncadd [#allocation8], %s44
      %s47 = sshll.u32 %s2, 4
      %s48 = int_to_ptr.vmem [resolvable:$true] %s47
      %50 = dma.vmem_to_smem %s48, 16, [#allocation7], [#allocation8]
    $region13: #{tpu_custom_call.1} parent=1 // pred_fallthru
      _
    // Predicated region
    $region14: #{tpu_custom_call.1} parent=1 // pred_check
      _
    $region15: #{tpu_custom_call.1} parent=1 // pred_check_branch
      %52 = sbr.rel (0) target = $region17
    $region16: #{tpu_custom_call.1} parent=1 // pred_region
      %s54 = ssub.s32 64, 64
      %55 = vsyncadd [#allocation8], %s54
      %s57 = sshll.u32 %s3, 4
      %s58 = int_to_ptr.vmem [resolvable:$true] %s57
      %60 = dma.vmem_to_smem %s58, 64, [#allocation9], [#allocation8]
    $region17: #{tpu_custom_call.1} parent=1 // pred_fallthru
      _
    // Predicated region
    $region18: #{tpu_custom_call.1} parent=1 // pred_check
      _
    $region19: #{tpu_custom_call.1} parent=1 // pred_check_branch
      %62 = sbr.rel (0) target = $region21
    $region20: #{tpu_custom_call.1} parent=1 // pred_region
      %s64 = ssub.s32 16, 16
      %65 = vsyncadd [#allocation11], %s64
      %s67 = sshll.u32 %s4, 4
      %s68 = int_to_ptr.vmem [resolvable:$true] %s67
      %70 = dma.vmem_to_smem %s68, 16, [#allocation10], [#allocation11]
    $region21: #{tpu_custom_call.1} parent=1 // pred_fallthru
      _
    // Predicated region
    $region22: #{tpu_custom_call.1} parent=1 // pred_check
      _
    $region23: #{tpu_custom_call.1} parent=1 // pred_check_branch
      %72 = sbr.rel (0) target = $region25
    $region24: #{tpu_custom_call.1} parent=1 // pred_region
      %s74 = ssub.s32 64, 64
      %75 = vsyncadd [#allocation11], %s74
      %s77 = sshll.u32 %s5, 4
      %s78 = int_to_ptr.vmem [resolvable:$true] %s77
      %80 = dma.vmem_to_smem %s78, 64, [#allocation12], [#allocation11]
    $region25: #{tpu_custom_call.1} parent=1 // pred_fallthru
      _
    // Predicated region
    $region26: #{tpu_custom_call.1} parent=1 // pred_check
      _
    $region27: #{tpu_custom_call.1} parent=1 // pred_check_branch
      %82 = sbr.rel (0) target = $region29
    $region28: #{tpu_custom_call.1} parent=1 // pred_region
      %s84 = ssub.s32 16, 16
      %85 = vsyncadd [#allocation14], %s84
      %s87 = sshll.u32 %s6, 4
      %s88 = int_to_ptr.vmem [resolvable:$true] %s87
      %90 = dma.vmem_to_smem %s88, 16, [#allocation13], [#allocation14]
    $region29: #{tpu_custom_call.1} parent=1 // pred_fallthru
      _
    // Predicated region
    $region30: #{tpu_custom_call.1} parent=1 // pred_check
      _
    $region31: #{tpu_custom_call.1} parent=1 // pred_check_branch
      %92 = sbr.rel (0) target = $region33
    $region32: #{tpu_custom_call.1} parent=1 // pred_region
      %s94 = ssub.s32 64, 64
      %95 = vsyncadd [#allocation14], %s94
      %s97 = sshll.u32 %s7, 4
      %s98 = int_to_ptr.vmem [resolvable:$true] %s97
      %100 = dma.vmem_to_smem %s98, 64, [#allocation15], [#allocation14]
    $region33: #{tpu_custom_call.1} parent=1 // pred_fallthru
      _
    // Predicated region
    $region34: #{tpu_custom_call.1} parent=1 // pred_check
      _
    $region35: #{tpu_custom_call.1} parent=1 // pred_check_branch
      %102 = sbr.rel (0) target = $region37
    $region36: #{tpu_custom_call.1} parent=1 // pred_region
      %s104 = ssub.s32 16, 16
      %105 = vsyncadd [#allocation17], %s104
      %s107 = sshll.u32 %s8, 4
      %s108 = int_to_ptr.vmem [resolvable:$true] %s107
      %110 = dma.vmem_to_smem %s108, 16, [#allocation16], [#allocation17]
    $region37: #{tpu_custom_call.1} parent=1 // pred_fallthru
      _
    // Predicated region
    $region38: #{tpu_custom_call.1} parent=1 // pred_check
      _
    $region39: #{tpu_custom_call.1} parent=1 // pred_check_branch
      %112 = sbr.rel (0) target = $region41
    $region40: #{tpu_custom_call.1} parent=1 // pred_region
      %113 = dma.done [#allocation3], 32
    $region41: #{tpu_custom_call.1} parent=1 // pred_fallthru
      _
    // Predicated region
    $region42: #{tpu_custom_call.1} parent=1 // pred_check
      _
    $region43: #{tpu_custom_call.1} parent=1 // pred_check_branch
      %115 = sbr.rel (0) target = $region45
    $region44: #{tpu_custom_call.1} parent=1 // pred_region
      %116 = dma.done [#allocation5], 64
    $region45: #{tpu_custom_call.1} parent=1 // pred_fallthru
      _
    // Predicated region
    $region46: #{tpu_custom_call.1} parent=1 // pred_check
      _
    $region47: #{tpu_custom_call.1} parent=1 // pred_check_branch
      %118 = sbr.rel (0) target = $region49
    $region48: #{tpu_custom_call.1} parent=1 // pred_region
      %119 = dma.done [#allocation8], 16
    $region49: #{tpu_custom_call.1} parent=1 // pred_fallthru
      _
    // Predicated region
    $region50: #{tpu_custom_call.1} parent=1 // pred_check
      _
    $region51: #{tpu_custom_call.1} parent=1 // pred_check_branch
      %121 = sbr.rel (0) target = $region53
    $region52: #{tpu_custom_call.1} parent=1 // pred_region
      %122 = dma.done [#allocation8], 64
    $region53: #{tpu_custom_call.1} parent=1 // pred_fallthru
      _
    // Predicated region
    $region54: #{tpu_custom_call.1} parent=1 // pred_check
      _
    $region55: #{tpu_custom_call.1} parent=1 // pred_check_branch
      %124 = sbr.rel (0) target = $region57
    $region56: #{tpu_custom_call.1} parent=1 // pred_region
      %125 = dma.done [#allocation11], 16
    $region57: #{tpu_custom_call.1} parent=1 // pred_fallthru
      _
    // Predicated region
    $region58: #{tpu_custom_call.1} parent=1 // pred_check
      _
    $region59: #{tpu_custom_call.1} parent=1 // pred_check_branch
      %127 = sbr.rel (0) target = $region61
    $region60: #{tpu_custom_call.1} parent=1 // pred_region
      %128 = dma.done [#allocation11], 64
    $region61: #{tpu_custom_call.1} parent=1 // pred_fallthru
      _
    // Predicated region
    $region62: #{tpu_custom_call.1} parent=1 // pred_check
      _
    $region63: #{tpu_custom_call.1} parent=1 // pred_check_branch
      %130 = sbr.rel (0) target = $region65
    $region64: #{tpu_custom_call.1} parent=1 // pred_region
      %131 = dma.done [#allocation14], 16
    $region65: #{tpu_custom_call.1} parent=1 // pred_fallthru
      _
    // Predicated region
    $region66: #{tpu_custom_call.1} parent=1 // pred_check
      _
    $region67: #{tpu_custom_call.1} parent=1 // pred_check_branch
      %133 = sbr.rel (0) target = $region69
    $region68: #{tpu_custom_call.1} parent=1 // pred_region
      %134 = dma.done [#allocation14], 64
    $region69: #{tpu_custom_call.1} parent=1 // pred_fallthru
      _
    // Predicated region
    $region70: #{tpu_custom_call.1} parent=1 // pred_check
      _
    $region71: #{tpu_custom_call.1} parent=1 // pred_check_branch
      %136 = sbr.rel (0) target = $region73
    $region72: #{tpu_custom_call.1} parent=1 // pred_region
      %137 = dma.done [#allocation17], 16
    $region73: #{tpu_custom_call.1} parent=1 // pred_fallthru
      _
    %138 = sfence
    %v139 = vld [vmem:[#allocation2] sm:$0x1]
    %v140 = vld [vmem:[#allocation2 + $0x1] sm:$0x1]
    %s141 = sld [smem:[#allocation6]]
    %v142 = vstv %s141
    %v143 = vmul.f32 %v139, %v142
    %s144 = sld [smem:[#allocation6 + $0x1]]
    %v145 = vstv %s144
    %v146 = vmul.f32 %v140, %v145
    %v147 = vadd.f32 %v143, %v146
    %s148 = sld [smem:[#allocation7]]
    %v149 = vstv %s148
    %v150 = vadd.f32 %v147, %v149
    %v151 = vmax.f32 %v150, 0.0
    %152 = vst [vmem:[#allocation18] sm:$0x1] %v151
    %s153 = sld [smem:[#allocation6 + $0x80]]
    %v154 = vstv %s153
    %v155 = vmul.f32 %v139, %v154
    %s156 = sld [smem:[#allocation6 + $0x81]]
    %v157 = vstv %s156
    %v158 = vmul.f32 %v140, %v157
    %v159 = vadd.f32 %v155, %v158
    %s160 = sld [smem:[#allocation7 + $0x1]]
    %v161 = vstv %s160
    %v162 = vadd.f32 %v159, %v161
    %v163 = vmax.f32 %v162, 0.0
    %164 = vst [vmem:[#allocation18 + $0x1] sm:$0x1] %v163
    %s165 = sld [smem:[#allocation6 + $0x100]]
    %v166 = vstv %s165
    %v167 = vmul.f32 %v139, %v166
    %s168 = sld [smem:[#allocation6 + $0x101]]
    %v169 = vstv %s168
    %v170 = vmul.f32 %v140, %v169
    %v171 = vadd.f32 %v167, %v170
    %s172 = sld [smem:[#allocation7 + $0x2]]
    %v173 = vstv %s172
    %v174 = vadd.f32 %v171, %v173
    %v175 = vmax.f32 %v174, 0.0
    %176 = vst [vmem:[#allocation18 + $0x2] sm:$0x1] %v175
    %s177 = sld [smem:[#allocation6 + $0x180]]
    %v178 = vstv %s177
    %v179 = vmul.f32 %v139, %v178
    %s180 = sld [smem:[#allocation6 + $0x181]]
    %v181 = vstv %s180
    %v182 = vmul.f32 %v140, %v181
    %v183 = vadd.f32 %v179, %v182
    %s184 = sld [smem:[#allocation7 + $0x3]]
    %v185 = vstv %s184
    %v186 = vadd.f32 %v183, %v185
    %v187 = vmax.f32 %v186, 0.0
    %188 = vst [vmem:[#allocation18 + $0x3] sm:$0x1] %v187
    %s189 = sld [smem:[#allocation9]]
    %v190 = vstv %s189
    %v191 = vmul.f32 %v151, %v190
    %s192 = sld [smem:[#allocation9 + $0x1]]
    %v193 = vstv %s192
    %v194 = vmul.f32 %v163, %v193
    %v195 = vadd.f32 %v191, %v194
    %s196 = sld [smem:[#allocation9 + $0x2]]
    %v197 = vstv %s196
    %v198 = vmul.f32 %v175, %v197
    %v199 = vadd.f32 %v195, %v198
    %s200 = sld [smem:[#allocation9 + $0x3]]
    %v201 = vstv %s200
    %v202 = vmul.f32 %v187, %v201
    %v203 = vadd.f32 %v199, %v202
    %s204 = sld [smem:[#allocation10]]
    %v205 = vstv %s204
    %v206 = vadd.f32 %v203, %v205
    %v207 = vmax.f32 %v206, 0.0
    %208 = vst [vmem:[#allocation18 + $0x4] sm:$0x1] %v207
    %s209 = sld [smem:[#allocation9 + $0x80]]
    %v210 = vstv %s209
    %v211 = vmul.f32 %v151, %v210
    %s212 = sld [smem:[#allocation9 + $0x81]]
    %v213 = vstv %s212
    %v214 = vmul.f32 %v163, %v213
    %v215 = vadd.f32 %v211, %v214
    %s216 = sld [smem:[#allocation9 + $0x82]]
    %v217 = vstv %s216
    %v218 = vmul.f32 %v175, %v217
    %v219 = vadd.f32 %v215, %v218
    %s220 = sld [smem:[#allocation9 + $0x83]]
    %v221 = vstv %s220
    %v222 = vmul.f32 %v187, %v221
    %v223 = vadd.f32 %v219, %v222
    %s224 = sld [smem:[#allocation10 + $0x1]]
    %v225 = vstv %s224
    %v226 = vadd.f32 %v223, %v225
    %v227 = vmax.f32 %v226, 0.0
    %228 = vst [vmem:[#allocation18 + $0x5] sm:$0x1] %v227
    %s229 = sld [smem:[#allocation9 + $0x100]]
    %v230 = vstv %s229
    %v231 = vmul.f32 %v151, %v230
    %s232 = sld [smem:[#allocation9 + $0x101]]
    %v233 = vstv %s232
    %v234 = vmul.f32 %v163, %v233
    %v235 = vadd.f32 %v231, %v234
    %s236 = sld [smem:[#allocation9 + $0x102]]
    %v237 = vstv %s236
    %v238 = vmul.f32 %v175, %v237
    %v239 = vadd.f32 %v235, %v238
    %s240 = sld [smem:[#allocation9 + $0x103]]
    %v241 = vstv %s240
    %v242 = vmul.f32 %v187, %v241
    %v243 = vadd.f32 %v239, %v242
    %s244 = sld [smem:[#allocation10 + $0x2]]
    %v245 = vstv %s244
    %v246 = vadd.f32 %v243, %v245
    %v247 = vmax.f32 %v246, 0.0
    %248 = vst [vmem:[#allocation18 + $0x6] sm:$0x1] %v247
    %s249 = sld [smem:[#allocation9 + $0x180]]
    %v250 = vstv %s249
    %v251 = vmul.f32 %v151, %v250
    %s252 = sld [smem:[#allocation9 + $0x181]]
    %v253 = vstv %s252
    %v254 = vmul.f32 %v163, %v253
    %v255 = vadd.f32 %v251, %v254
    %s256 = sld [smem:[#allocation9 + $0x182]]
    %v257 = vstv %s256
    %v258 = vmul.f32 %v175, %v257
    %v259 = vadd.f32 %v255, %v258
    %s260 = sld [smem:[#allocation9 + $0x183]]
    %v261 = vstv %s260
    %v262 = vmul.f32 %v187, %v261
    %v263 = vadd.f32 %v259, %v262
    %s264 = sld [smem:[#allocation10 + $0x3]]
    %v265 = vstv %s264
    %v266 = vadd.f32 %v263, %v265
    %v267 = vmax.f32 %v266, 0.0
    %268 = vst [vmem:[#allocation18 + $0x7] sm:$0x1] %v267
    %s269 = sld [smem:[#allocation12]]
    %v270 = vstv %s269
    %v271 = vmul.f32 %v207, %v270
    %s272 = sld [smem:[#allocation12 + $0x1]]
    %v273 = vstv %s272
    %v274 = vmul.f32 %v227, %v273
    %v275 = vadd.f32 %v271, %v274
    %s276 = sld [smem:[#allocation12 + $0x2]]
    %v277 = vstv %s276
    %v278 = vmul.f32 %v247, %v277
    %v279 = vadd.f32 %v275, %v278
    %s280 = sld [smem:[#allocation12 + $0x3]]
    %v281 = vstv %s280
    %v282 = vmul.f32 %v267, %v281
    %v283 = vadd.f32 %v279, %v282
    %s284 = sld [smem:[#allocation13]]
    %v285 = vstv %s284
    %v286 = vadd.f32 %v283, %v285
    %v287 = vmax.f32 %v286, 0.0
    %288 = vst [vmem:[#allocation18 + $0x8] sm:$0x1] %v287
    %s289 = sld [smem:[#allocation12 + $0x80]]
    %v290 = vstv %s289
    %v291 = vmul.f32 %v207, %v290
    %s292 = sld [smem:[#allocation12 + $0x81]]
    %v293 = vstv %s292
    %v294 = vmul.f32 %v227, %v293
    %v295 = vadd.f32 %v291, %v294
    %s296 = sld [smem:[#allocation12 + $0x82]]
    %v297 = vstv %s296
    %v298 = vmul.f32 %v247, %v297
    %v299 = vadd.f32 %v295, %v298
    %s300 = sld [smem:[#allocation12 + $0x83]]
    %v301 = vstv %s300
    %v302 = vmul.f32 %v267, %v301
    %v303 = vadd.f32 %v299, %v302
    %s304 = sld [smem:[#allocation13 + $0x1]]
    %v305 = vstv %s304
    %v306 = vadd.f32 %v303, %v305
    %v307 = vmax.f32 %v306, 0.0
    %308 = vst [vmem:[#allocation18 + $0x9] sm:$0x1] %v307
    %s309 = sld [smem:[#allocation12 + $0x100]]
    %v310 = vstv %s309
    %v311 = vmul.f32 %v207, %v310
    %s312 = sld [smem:[#allocation12 + $0x101]]
    %v313 = vstv %s312
    %v314 = vmul.f32 %v227, %v313
    %v315 = vadd.f32 %v311, %v314
    %s316 = sld [smem:[#allocation12 + $0x102]]
    %v317 = vstv %s316
    %v318 = vmul.f32 %v247, %v317
    %v319 = vadd.f32 %v315, %v318
    %s320 = sld [smem:[#allocation12 + $0x103]]
    %v321 = vstv %s320
    %v322 = vmul.f32 %v267, %v321
    %v323 = vadd.f32 %v319, %v322
    %s324 = sld [smem:[#allocation13 + $0x2]]
    %v325 = vstv %s324
    %v326 = vadd.f32 %v323, %v325
    %v327 = vmax.f32 %v326, 0.0
    %328 = vst [vmem:[#allocation18 + $0xa] sm:$0x1] %v327
    %s329 = sld [smem:[#allocation12 + $0x180]]
    %v330 = vstv %s329
    %v331 = vmul.f32 %v207, %v330
    %s332 = sld [smem:[#allocation12 + $0x181]]
    %v333 = vstv %s332
    %v334 = vmul.f32 %v227, %v333
    %v335 = vadd.f32 %v331, %v334
    %s336 = sld [smem:[#allocation12 + $0x182]]
    %v337 = vstv %s336
    %v338 = vmul.f32 %v247, %v337
    %v339 = vadd.f32 %v335, %v338
    %s340 = sld [smem:[#allocation12 + $0x183]]
    %v341 = vstv %s340
    %v342 = vmul.f32 %v267, %v341
    %v343 = vadd.f32 %v339, %v342
    %s344 = sld [smem:[#allocation13 + $0x3]]
    %v345 = vstv %s344
    %v346 = vadd.f32 %v343, %v345
    %v347 = vmax.f32 %v346, 0.0
    %348 = vst [vmem:[#allocation18 + $0xb] sm:$0x1] %v347
    %s349 = sld [smem:[#allocation15]]
    %v350 = vstv %s349
    %v351 = vmul.f32 %v287, %v350
    %s352 = sld [smem:[#allocation15 + $0x1]]
    %v353 = vstv %s352
    %v354 = vmul.f32 %v307, %v353
    %v355 = vadd.f32 %v351, %v354
    %s356 = sld [smem:[#allocation15 + $0x2]]
    %v357 = vstv %s356
    %v358 = vmul.f32 %v327, %v357
    %v359 = vadd.f32 %v355, %v358
    %s360 = sld [smem:[#allocation15 + $0x3]]
    %v361 = vstv %s360
    %v362 = vmul.f32 %v347, %v361
    %v363 = vadd.f32 %v359, %v362
    %s364 = sld [smem:[#allocation16]]
    %v365 = vstv %s364
    %v366 = vadd.f32 %v363, %v365
    %367 = vst [vmem:[#allocation18 + $0xc] sm:$0x1] %v366
    %s368 = sld [smem:[#allocation15 + $0x80]]
    %v369 = vstv %s368
    %v370 = vmul.f32 %v287, %v369
    %s371 = sld [smem:[#allocation15 + $0x81]]
    %v372 = vstv %s371
    %v373 = vmul.f32 %v307, %v372
    %v374 = vadd.f32 %v370, %v373
    %s375 = sld [smem:[#allocation15 + $0x82]]
    %v376 = vstv %s375
    %v377 = vmul.f32 %v327, %v376
    %v378 = vadd.f32 %v374, %v377
    %s379 = sld [smem:[#allocation15 + $0x83]]
    %v380 = vstv %s379
    %v381 = vmul.f32 %v347, %v380
    %v382 = vadd.f32 %v378, %v381
    %s383 = sld [smem:[#allocation16 + $0x1]]
    %v384 = vstv %s383
    %v385 = vadd.f32 %v382, %v384
    %386 = vst [vmem:[#allocation18 + $0xd] sm:$0x1] %v385
    %s387 = sld [smem:[#allocation15 + $0x100]]
    %v388 = vstv %s387
    %v389 = vmul.f32 %v287, %v388
    %s390 = sld [smem:[#allocation15 + $0x101]]
    %v391 = vstv %s390
    %v392 = vmul.f32 %v307, %v391
    %v393 = vadd.f32 %v389, %v392
    %s394 = sld [smem:[#allocation15 + $0x102]]
    %v395 = vstv %s394
    %v396 = vmul.f32 %v327, %v395
    %v397 = vadd.f32 %v393, %v396
    %s398 = sld [smem:[#allocation15 + $0x103]]
    %v399 = vstv %s398
    %v400 = vmul.f32 %v347, %v399
    %v401 = vadd.f32 %v397, %v400
    %s402 = sld [smem:[#allocation16 + $0x2]]
    %v403 = vstv %s402
    %v404 = vadd.f32 %v401, %v403
    %405 = vst [vmem:[#allocation18 + $0xe] sm:$0x1] %v404
    %s406 = sld [smem:[#allocation15 + $0x180]]
    %v407 = vstv %s406
    %v408 = vmul.f32 %v287, %v407
    %s409 = sld [smem:[#allocation15 + $0x181]]
    %v410 = vstv %s409
    %v411 = vmul.f32 %v307, %v410
    %v412 = vadd.f32 %v408, %v411
    %s413 = sld [smem:[#allocation15 + $0x182]]
    %v414 = vstv %s413
    %v415 = vmul.f32 %v327, %v414
    %v416 = vadd.f32 %v412, %v415
    %s417 = sld [smem:[#allocation15 + $0x183]]
    %v418 = vstv %s417
    %v419 = vmul.f32 %v347, %v418
    %v420 = vadd.f32 %v416, %v419
    %s421 = sld [smem:[#allocation16 + $0x3]]
    %v422 = vstv %s421
    %v423 = vadd.f32 %v420, %v422
    %424 = vst [vmem:[#allocation18 + $0xf] sm:$0x1] %v423
    // Predicated region
    $region74: #{tpu_custom_call.1} parent=1 // pred_check
      _
    $region75: #{tpu_custom_call.1} parent=1 // pred_check_branch
      %426 = sbr.rel (0) target = $region77
    $region76: #{tpu_custom_call.1} parent=1 // pred_region
      %s428 = ssub.s32 256, 256
      %429 = vsyncadd [#allocation4], %s428
      %s430 = sshll.u32 [#allocation18], 4
      %s431 = int_to_ptr.vmem [resolvable:$true] %s430
      %436 = dma.vmem_to_hbm [thread:$0]  %s431, 256, %s9, [#allocation4], 128, 128, 8
    $region77: #{tpu_custom_call.1} parent=1 // pred_fallthru
      _
    // Predicated region
    $region78: #{tpu_custom_call.1} parent=1 // pred_check
      _
    $region79: #{tpu_custom_call.1} parent=1 // pred_check_branch
      %438 = sbr.rel (0) target = $region81
    $region80: #{tpu_custom_call.1} parent=1 // pred_region
      %439 = dma.done [#allocation4], 256
    $region81: #{tpu_custom_call.1} parent=1 // pred_fallthru
      _
    %440 = vsyncpa [#allocation3], 1
    %441 = vsyncpa [#allocation4], 1
    %442 = vsyncpa [#allocation5], 1
    %443 = vsyncpa [#allocation8], 1
    %444 = vsyncpa [#allocation11], 1
    %445 = vsyncpa [#allocation14], 1
    %446 = vsyncpa [#allocation17], 1

</llo_original>
